<compile_context>
chip_gen: v7x
topology: tpu7x:2x2x1
jax: 0.10.0
libtpu: 0.0.40
codegen_flags: <defaults>
</compile_context>

<pallas_src>
from functools import partial

import jax
import jax.numpy as jnp
from jax.experimental import pallas as pl
from jax.experimental.pallas import tpu as pltpu


# ----------------------------------------------------------------------------
# helpers
# ----------------------------------------------------------------------------
def _round_up(x, m):
    return (x + m - 1) // m * m


def _vmem_limit_bytes():
    """Per-generation VMEM budget with headroom (v7x only has 64 MiB/TC)."""
    cap = 128 * 1024 * 1024
    try:
        cap = int(pltpu.get_tpu_info().vmem_capacity_bytes)
    except Exception:
        pass
    return max(32 * 1024 * 1024, min(cap // 2, 64 * 1024 * 1024))


_VMEM_LIMIT = _vmem_limit_bytes()
_VMEM_BUDGET = (_VMEM_LIMIT * 11) // 20      # ~55% of the scoped limit for tiles

LAYER_STRIDES = (1, 2, 2, 2)


# ----------------------------------------------------------------------------
# tile selection
# ----------------------------------------------------------------------------
def _pick_k_tile(K):
    """Reduction tile: full K when it fits, else a 128-multiple divisor of K."""
    if K <= 2048:
        return K
    for t in (2048, 1536, 1152, 1024, 768, 512, 384, 256, 128):
        if K % t == 0:
            return t
    return 2048  # pathological K only: caller zero-pads (never hit for ResNet)


def _pick_m_tile(M, tk, tn, x_isz, out_isz, res_isz, multi_k):
    """Largest M tile whose double-buffered working set fits the VMEM budget."""
    fixed = 2 * tk * tn * 2 + 2 * tn * 4          # weight tiles (bf16) + bias
    for tm in (1024, 512, 256, 128, 64, 32, 16, 8):
        tm_eff = M if tm >= M else tm             # full M -> single (exact) block
        need = (2 * tm_eff * tk * x_isz           # x tiles (double buffered)
                + 2 * tm_eff * tn * out_isz       # out tiles
                + 2 * tm_eff * tn * res_isz       # residual tiles
                + (tm_eff * tn * 4 if multi_k else 0))   # f32 accumulator scratch
        if fixed + need <= _VMEM_BUDGET or tm == 8:
            return tm_eff
    return min(M, 8)


def _pick_n_tile(N, m_tiles):
    """Output-channel tile.

    Full N (the big x operand is streamed from HBM exactly once) unless the M
    axis collapses to a single tile, in which case N is split in two so a
    2-TensorCore chip (v7x) still gets two parallel blocks.  tn is always a
    multiple of 128 or the full dimension.
    """
    if N % 128 != 0 or N <= 128:
        return N
    tn = N if N <= 2048 else 2048
    if m_tiles == 1 and N >= 256:
        half = N // 2
        if half % 128 == 0:
            tn = min(tn, half)
    return tn


# ----------------------------------------------------------------------------
# matmul kernels
# ----------------------------------------------------------------------------
def _mm_kernel_single(*refs, relu, has_res):
    """One-shot matmul + bias (+residual) (+ReLU): no accumulator scratch."""
    if has_res:
        x_ref, w_ref, b_ref, r_ref, o_ref = refs
    else:
        x_ref, w_ref, b_ref, o_ref = refs
        r_ref = None
    y = jnp.dot(x_ref[...], w_ref[...], preferred_element_type=jnp.float32)
    y = y + b_ref[...].astype(jnp.float32)
    if has_res:
        y = y + r_ref[...].astype(jnp.float32)
    if relu:
        y = jnp.maximum(y, 0.0)
    o_ref[...] = y.astype(o_ref.dtype)


def _mm_kernel_multi(*refs, relu, has_res):
    """K-tiled matmul: f32 VMEM accumulator, epilogue fused on the last K step."""
    if has_res:
        x_ref, w_ref, b_ref, r_ref, o_ref, acc_ref = refs
    else:
        x_ref, w_ref, b_ref, o_ref, acc_ref = refs
        r_ref = None
    k = pl.program_id(2)
    part = jnp.dot(x_ref[...], w_ref[...], preferred_element_type=jnp.float32)

    @pl.when(k == 0)
    def _():
        acc_ref[...] = part            # first K step: store (no zero-init pass)

    @pl.when(k > 0)
    def _():
        acc_ref[...] += part

    @pl.when(k == pl.num_programs(2) - 1)
    def _():
        y = acc_ref[...] + b_ref[...].astype(jnp.float32)
        if has_res:
            y = y + r_ref[...].astype(jnp.float32)
        if relu:
            y = jnp.maximum(y, 0.0)
        o_ref[...] = y.astype(o_ref.dtype)


def fused_matmul(x, w, b, res=None, relu=False, out_dtype=None):
    """y = act(x @ w + b [+ res]).  x:(M,K), w:(K,N), b:(N,), res:(M,N)|None.

    Partial edge blocks (grid = cdiv) replace the old jnp.pad copies of the
    big operands; K is never padded for ResNet shapes (tk always divides K).
    """
    M, K = x.shape
    K2, N = w.shape
    assert K == K2, (K, K2)
    out_dtype = out_dtype or x.dtype
    has_res = res is not None

    tk = _pick_k_tile(K)
    if K % tk:                                     # pathological K only
        Kp = _round_up(K, tk)
        x = jnp.pad(x, ((0, 0), (0, Kp - K)))
        w = jnp.pad(w, ((0, Kp - K), (0, 0)))
        K = Kp
    grid_k = K // tk
    multi_k = grid_k > 1

    x_isz = x.dtype.itemsize
    out_isz = jnp.dtype(out_dtype).itemsize
    res_isz = res.dtype.itemsize if has_res else 0

    tn0 = N if (N % 128 != 0 or N <= 2048) else 2048
    tm = _pick_m_tile(M, tk, tn0, x_isz, out_isz, res_isz, multi_k)
    grid_m = pl.cdiv(M, tm)
    tn = _pick_n_tile(N, grid_m)
    grid_n = pl.cdiv(N, tn)

    b2 = b.reshape(1, N)
    inputs = [x, w, b2]

    if multi_k:
        in_specs = [
            pl.BlockSpec((tm, tk), lambda i, j, k: (i, k)),
            pl.BlockSpec((tk, tn), lambda i, j, k: (k, j)),
            pl.BlockSpec((1, tn), lambda i, j, k: (0, j)),
        ]
        out_spec = pl.BlockSpec((tm, tn), lambda i, j, k: (i, j))
        if has_res:
            inputs.append(res)
            in_specs.append(pl.BlockSpec((tm, tn), lambda i, j, k: (i, j)))
        kernel = partial(_mm_kernel_multi, relu=relu, has_res=has_res)
        grid = (grid_m, grid_n, grid_k)
        scratch = [pltpu.VMEM((tm, tn), jnp.float32)]
        semantics = ("parallel", "parallel", "arbitrary")
    else:
        in_specs = [
            pl.BlockSpec((tm, tk), lambda i, j: (i, 0)),
            pl.BlockSpec((tk, tn), lambda i, j: (0, j)),
            pl.BlockSpec((1, tn), lambda i, j: (0, j)),
        ]
        out_spec = pl.BlockSpec((tm, tn), lambda i, j: (i, j))
        if has_res:
            inputs.append(res)
            in_specs.append(pl.BlockSpec((tm, tn), lambda i, j: (i, j)))
        kernel = partial(_mm_kernel_single, relu=relu, has_res=has_res)
        grid = (grid_m, grid_n)
        scratch = []
        semantics = ("parallel", "parallel")

    return pl.pallas_call(
        kernel,
        out_shape=jax.ShapeDtypeStruct((M, N), out_dtype),
        grid=grid,
        in_specs=in_specs,
        out_specs=out_spec,
        scratch_shapes=scratch,
        compiler_params=pltpu.CompilerParams(
            dimension_semantics=semantics,
            vmem_limit_bytes=_VMEM_LIMIT),
    )(*inputs)


# ----------------------------------------------------------------------------
# direct (implicit-GEMM) 3x3 stride-1 conv kernel
# ----------------------------------------------------------------------------
def _conv3x3_kernel(x_ref, w_ref, b_ref, o_ref, *, tap_offsets, m_out, relu):
    # x_ref: (1, Hp*Wp, Cin)  flattened padded image for one batch element
    # w_ref: (9, Cin, tco)    per-tap weight slices
    # b_ref: (1, tco)
    # o_ref: (1, m_out, tco)  flattened (OH, Wp) output rows (pad cols = garbage)
    acc = None
    for t, off in enumerate(tap_offsets):
        xs = x_ref[0, off:off + m_out, :]
        part = jnp.dot(xs, w_ref[t], preferred_element_type=jnp.float32)
        acc = part if acc is None else acc + part
    y = acc + b_ref[...].astype(jnp.float32)
    if relu:
        y = jnp.maximum(y, 0.0)
    o_ref[0] = y.astype(o_ref.dtype)


def _conv3x3_direct_fits(H, W, cin, cout):
    """Check the per-step VMEM working set of the direct 3x3 kernel."""
    Wp, Hp = W + 2, H + 3
    tco = cout if cout <= 256 else 256
    m_out = H * Wp
    need = (2 * Hp * Wp * cin * 2          # x plane (double buffered, bf16)
            + 2 * 9 * cin * tco * 2        # weight tile
            + 2 * m_out * tco * 2          # output tile
            + 2 * m_out * tco * 4          # f32 accumulator + dot temporaries
            + 2 * tco * 4)
    return need <= _VMEM_BUDGET


def conv3x3_s1_bn(x, w, b, *, relu):
    """Direct 3x3 stride-1 conv + folded BN (+ReLU) on NHWC, no im2col.

    The padded image is flattened to (Hp*Wp, Cin) rows; each of the 9 taps is
    then a statically shifted window of the row axis, accumulated in f32
    inside a single kernel invocation.  Two garbage output columns per row
    (the width padding) are computed and sliced off afterwards.
    """
    N, H, W, cin = x.shape
    cout = w.shape[1]
    OH, OW = H, W
    Wp = W + 2
    Hp = H + 3                             # 1 top + 2 bottom pad rows: keeps the
    #                                        shifted windows in bounds for every tap
    xp = jnp.pad(x, ((0, 0), (1, 2), (1, 1), (0, 0)))
    xf = xp.reshape(N, Hp * Wp, cin)
    m_out = OH * Wp
    taps = tuple(di * Wp + dj for di in range(3) for dj in range(3))
    w3 = w.reshape(9, cin, cout)           # (kh, kw, cin) row ordering -> per-tap
    b2 = b.reshape(1, cout)

    tco = cout if cout <= 256 else 256     # >=2 cout tiles for layer3/4 (megacore)
    grid = (cout // tco, N)                # batch innermost: weight tile is reused

    out = pl.pallas_call(
        partial(_conv3x3_kernel, tap_offsets=taps, m_out=m_out, relu=relu),
        out_shape=jax.ShapeDtypeStruct((N, m_out, cout), x.dtype),
        grid=grid,
        in_specs=[
            pl.BlockSpec((1, Hp * Wp, cin), lambda j, n: (n, 0, 0)),
            pl.BlockSpec((9, cin, tco), lambda j, n: (0, 0, j)),
            pl.BlockSpec((1, tco), lambda j, n: (0, j)),
        ],
        out_specs=pl.BlockSpec((1, m_out, tco), lambda j, n: (n, 0, j)),
        compiler_params=pltpu.CompilerParams(
            dimension_semantics=("parallel", "parallel"),
            vmem_limit_bytes=_VMEM_LIMIT),
    )(xf, w3, b2)

    return out.reshape(N, OH, Wp, cout)[:, :, :OW, :]


# ----------------------------------------------------------------------------
# conv (+folded BN) (+residual) (+ReLU)
# ----------------------------------------------------------------------------
def _im2col(x, kh, kw, stride, pad):
    """NHWC -> (N, OH, OW, KH*KW*Cin) patches, ordered (kh, kw, cin)."""
    # NOTE: weights are laid out (KH, KW, Cin, Cout) flattened on the first
    # three axes to match; PyTorch (Cout, Cin, KH, KW) weights need a permute.
    N, H, W, C = x.shape
    if pad > 0:
        x = jnp.pad(x, ((0, 0), (pad, pad), (pad, pad), (0, 0)))
    OH = (H + 2 * pad - kh) // stride + 1
    OW = (W + 2 * pad - kw) // stride + 1
    cols = [x[:, i:i + stride * OH:stride, j:j + stride * OW:stride, :]
            for i in range(kh) for j in range(kw)]
    return jnp.concatenate(cols, axis=-1), OH, OW


@partial(jax.jit, static_argnames=("ksize", "stride", "pad", "relu"))
def conv_bn(x, w, b, res=None, *, ksize, stride, pad, relu):
    """NHWC conv (no bias) + folded BN (+ fused residual) (+ ReLU)."""
    N = x.shape[0]
    cin = x.shape[3]
    cout = w.shape[1]

    if (ksize == 3 and stride == 1 and res is None
            and _conv3x3_direct_fits(x.shape[1], x.shape[2], cin, cout)):
        return conv3x3_s1_bn(x, w, b, relu=relu)

    if ksize == 1:
        # 1x1 conv: plain reshape; stride is spatial subsampling.
        if stride > 1:
            x = x[:, ::stride, ::stride, :]
        OH, OW = x.shape[1], x.shape[2]
        patches = x.reshape(N * OH * OW, cin)
    else:
        # TODO(synk): the 7x7 stem and the three stride-2 3x3 convs still use
        # materialized im2col; a strided implicit-GEMM variant would remove
        # the remaining (small, one-off) expansion.
        patches, OH, OW = _im2col(x, ksize, ksize, stride, pad)
        patches = patches.reshape(N * OH * OW, ksize * ksize * cin)

    res2 = None if res is None else res.reshape(N * OH * OW, cout)
    y = fused_matmul(patches, w, b, res=res2, relu=relu)
    return y.reshape(N, OH, OW, cout)


def bottleneck(x, p, stride):
    if "downsample" in p:
        identity = conv_bn(x, p["downsample"]["w"], p["downsample"]["b"],
                           ksize=1, stride=stride, pad=0, relu=False)
    else:
        identity = x
    out = conv_bn(x, p["conv1"]["w"], p["conv1"]["b"],
                  ksize=1, stride=1, pad=0, relu=True)
    out = conv_bn(out, p["conv2"]["w"], p["conv2"]["b"],
                  ksize=3, stride=stride, pad=1, relu=True)
    # conv3 with the residual add + ReLU fused into the matmul epilogue.
    out = conv_bn(out, p["conv3"]["w"], p["conv3"]["b"], res=identity,
                  ksize=1, stride=1, pad=0, relu=True)
    return out


# ----------------------------------------------------------------------------
# pooling & head
# ----------------------------------------------------------------------------
@jax.jit
def maxpool_3x3_s2(x):
    """MaxPool2d(kernel=3, stride=2, padding=1) on NHWC: fused pairwise-max tree."""
    N, H, W, C = x.shape
    k, s, p = 3, 2, 1
    OH = (H + 2 * p - k) // s + 1
    OW = (W + 2 * p - k) // s + 1
    xp = jnp.pad(x, ((0, 0), (p, p), (p, p), (0, 0)),
                 constant_values=-jnp.inf)
    out = None
    for i in range(k):
        for j in range(k):
            tap = xp[:, i:i + s * OH:s, j:j + s * OW:s, :]
            out = tap if out is None else jnp.maximum(out, tap)
    return out


@partial(jax.jit, static_argnames=("num_classes",))
def head(x, fc_w, fc_b, *, num_classes):
    # AdaptiveAvgPool2d((1,1)) + flatten: sub-microsecond reduction -> plain XLA.
    feats = jnp.mean(x.astype(jnp.float32), axis=(1, 2))
    # fc weights are zero-padded to a multiple of 128 columns (lane-dense store).
    logits = fused_matmul(feats.astype(jnp.bfloat16), fc_w, fc_b,
                          relu=False, out_dtype=jnp.float32)
    return logits[:, :num_classes]


# ----------------------------------------------------------------------------
# parameters (deterministic synthetic init; BN folded into conv scale/bias)
# ----------------------------------------------------------------------------
def _make_conv_bn_params(key, kh, kw, cin, cout, eps=1e-5):
    k1, k2, k3, k4, k5 = jax.random.split(key, 5)
    fan_in = kh * kw * cin
    w = jax.random.normal(k1, (kh * kw * cin, cout), jnp.float32) * (2.0 / fan_in) ** 0.5
    gamma = 1.0 + 0.1 * jax.random.normal(k2, (cout,), jnp.float32)
    beta = 0.1 * jax.random.normal(k3, (cout,), jnp.float32)
    r_mean = 0.1 * jax.random.normal(k4, (cout,), jnp.float32)
    r_var = jax.random.uniform(k5, (cout,), jnp.float32, 0.5, 1.5)
    scale = gamma / jnp.sqrt(r_var + eps)
    # Fold BN (inference mode) into the conv weight + bias; store weight bf16.
    # Weight layout is (KH*KW*Cin, Cout) with (kh, kw, cin) ordering — real
    # PyTorch (Cout, Cin, KH, KW) weights must be permuted before flattening.
    return {"w": (w * scale[None, :]).astype(jnp.bfloat16),
            "b": beta - r_mean * scale}


def build_resnet101_params(num_classes=10, seed=0):
    base = jax.random.PRNGKey(seed)
    counter = [0]

    def nk():
        counter[0] += 1
        return jax.random.fold_in(base, counter[0])

    params = {"stem": _make_conv_bn_params(nk(), 7, 7, 3, 64)}

    # ResNet-101 bottleneck configuration: (num_blocks, width).
    cfg = [(3, 64), (4, 128), (23, 256), (3, 512)]
    in_ch = 64
    layers = []
    for (nblocks, width), stride in zip(cfg, LAYER_STRIDES):
        blocks = []
        for bi in range(nblocks):
            s = stride if bi == 0 else 1
            blk = {
                "conv1": _make_conv_bn_params(nk(), 1, 1, in_ch, width),
                "conv2": _make_conv_bn_params(nk(), 3, 3, width, width),
                "conv3": _make_conv_bn_params(nk(), 1, 1, width, width * 4),
            }
            if bi == 0 and (s != 1 or in_ch != width * 4):
                blk["downsample"] = _make_conv_bn_params(nk(), 1, 1, in_ch, width * 4)
            blocks.append(blk)
            in_ch = width * 4
        layers.append(blocks)
    params["layers"] = layers

    bound = 1.0 / (2048 ** 0.5)
    kfc = nk()
    fc_w = jax.random.uniform(jax.random.fold_in(kfc, 0),
                              (2048, num_classes), jnp.float32, -bound, bound)
    fc_b = jax.random.uniform(jax.random.fold_in(kfc, 1),
                              (num_classes,), jnp.float32, -bound, bound)
    ncls_pad = max(128, _round_up(num_classes, 128))
    params["fc_w"] = jnp.pad(fc_w, ((0, 0), (0, ncls_pad - num_classes))).astype(jnp.bfloat16)
    params["fc_b"] = jnp.pad(fc_b, (0, ncls_pad - num_classes))
    params["num_classes"] = num_classes
    return params


# ----------------------------------------------------------------------------
# forward pass
# ----------------------------------------------------------------------------
def resnet101_forward(params, x_nchw):
    # layout: NCHW (PyTorch) at the boundary -> NHWC bf16 inside the kernels.
    x = jnp.transpose(x_nchw, (0, 2, 3, 1)).astype(jnp.bfloat16)

    # stem: conv7x7/2 + BN + ReLU + maxpool3x3/2
    x = conv_bn(x, params["stem"]["w"], params["stem"]["b"],
                ksize=7, stride=2, pad=3, relu=True)
    x = maxpool_3x3_s2(x)

    # residual stages
    for blocks, stride in zip(params["layers"], LAYER_STRIDES):
        for bi, blk in enumerate(blocks):
            s = stride if bi == 0 else 1
            x = bottleneck(x, blk, s)

    # head: global average pool + fc
    # TODO(synk): BN is evaluated in inference mode (running stats folded);
    # training-mode batch statistics are not reproduced.
    return head(x, params["fc_w"], params["fc_b"],
                num_classes=params["num_classes"])


# ----------------------------------------------------------------------------
# main
# ----------------------------------------------------------------------------
if __name__ == "__main__":
    num_classes = 10
    batch, channels, spatial = 2, 3, 32   # small but architecture-consistent

    key = jax.random.PRNGKey(0)
    x = jax.random.normal(key, (batch, channels, spatial, spatial), jnp.float32)

    params = build_resnet101_params(num_classes=num_classes, seed=0)

    logits = resnet101_forward(params, x)
    logits = jax.block_until_ready(logits)

    assert logits.shape == (batch, num_classes), logits.shape
    assert bool(jnp.all(jnp.isfinite(logits)))
    print("KERNEL_OK")
</pallas_src>

<mosaic_0001>
module attributes {stable_mosaic.version = 11 : i64} {
  func.func @_mm_kernel_single(%arg0: i32, %arg1: i32, %arg2: memref<512x147xbf16, #tpu.memory_space<vmem>>, %arg3: memref<147x64xbf16, #tpu.memory_space<vmem>>, %arg4: memref<1x64xf32, #tpu.memory_space<vmem>>, %arg5: memref<512x64xbf16, #tpu.memory_space<vmem>>) attributes {dimension_semantics = [#tpu.dimension_semantics<parallel>, #tpu.dimension_semantics<parallel>], iteration_bounds = array<i64: 1, 1>, scalar_prefetch = 0 : i64, scratch_operands = 0 : i64, tpu.core_type = #tpu.core_type<tc>, window_params = [{transform_indices = @transform_0, window_bounds = array<i64: 512, 147>}, {transform_indices = @transform_1, window_bounds = array<i64: 147, 64>}, {transform_indices = @transform_2, window_bounds = array<i64: 1, 64>}, {transform_indices = @transform_3, window_bounds = array<i64: 512, 64>}]} {
    %c0 = arith.constant 0 : index
    %c0_0 = arith.constant 0 : index
    %0 = vector.load %arg2[%c0, %c0_0] : memref<512x147xbf16, #tpu.memory_space<vmem>>, vector<512x147xbf16>
    %c0_1 = arith.constant 0 : index
    %c0_2 = arith.constant 0 : index
    %1 = vector.load %arg3[%c0_1, %c0_2] : memref<147x64xbf16, #tpu.memory_space<vmem>>, vector<147x64xbf16>
    %cst = arith.constant dense<0.000000e+00> : vector<512x64xf32>
    %2 = tpu.matmul %0, %1, %cst {dimension_numbers = #tpu.dot_dimension_numbers<[1], [0], [0], [1], [0, 0, 1, 1], [], []>} : vector<512x147xbf16>, vector<147x64xbf16>, vector<512x64xf32> -> vector<512x64xf32>
    %c0_3 = arith.constant 0 : index
    %c0_4 = arith.constant 0 : index
    %3 = vector.load %arg4[%c0_3, %c0_4] : memref<1x64xf32, #tpu.memory_space<vmem>>, vector<1x64xf32>
    %4 = vector.broadcast %3 : vector<1x64xf32> to vector<512x64xf32>
    %5 = arith.addf %2, %4 : vector<512x64xf32>
    %cst_5 = arith.constant 0.000000e+00 : f32
    %6 = vector.broadcast %cst_5 : f32 to vector<512x64xf32>
    %7 = arith.maximumf %5, %6 : vector<512x64xf32>
    %8 = arith.truncf %7 : vector<512x64xf32> to vector<512x64xbf16>
    %c0_6 = arith.constant 0 : index
    %c0_7 = arith.constant 0 : index
    %9 = vector.load %arg5[%c0_6, %c0_7] : memref<512x64xbf16, #tpu.memory_space<vmem>>, vector<512x64xbf16>
    tpu.vector_store %arg5[%c0_6, %c0_7], %8 {strides = array<i32>} : memref<512x64xbf16, #tpu.memory_space<vmem>>, vector<512x64xbf16>,
    return
  }
  func.func @transform_0(%arg0: i32, %arg1: i32) -> (i32, i32) {
    %c0_i32 = arith.constant 0 : i32
    %c0_i32_0 = arith.constant 0 : i32
    return %arg0, %c0_i32 : i32, i32
  }
  func.func @transform_1(%arg0: i32, %arg1: i32) -> (i32, i32) {
    %c0_i32 = arith.constant 0 : i32
    %c0_i32_0 = arith.constant 0 : i32
    return %c0_i32, %arg1 : i32, i32
  }
  func.func @transform_2(%arg0: i32, %arg1: i32) -> (i32, i32) {
    %c0_i32 = arith.constant 0 : i32
    %c0_i32_0 = arith.constant 0 : i32
    return %c0_i32, %arg1 : i32, i32
  }
  func.func @transform_3(%arg0: i32, %arg1: i32) -> (i32, i32) {
    %c0_i32 = arith.constant 0 : i32
    return %arg0, %arg1 : i32, i32
  }
}

</mosaic_0001>

<llo_original>
// kernel: conv_bn.1
$region0: #{conv_bn.1}
  #allocation0 [shape = 'u32[]', space=smem, size = 0x4, offset = 0x4, fixed_abs, tag = 'smem constant byte address 0x4 - core index']
  #allocation1 [shape = 'u32[144,128]{1,0:T(1,128)}', space=vmem, size = 0x12000, scoped, tag = 'internal scratch']
  %s0 = inlined_call_operand.hbm [shape: bf16[512,147], index: 0, kind: input, shape index: {}]
  %s1 = inlined_call_operand.hbm [shape: bf16[147,64], index: 1, kind: input, shape index: {}]
  %s2 = inlined_call_operand.hbm [shape: f32[1,64], index: 2, kind: input, shape index: {}]
  %s3 = inlined_call_operand.hbm [shape: bf16[512,64], index: 3, kind: output, shape index: {}]
  %s4 = sld [smem:[#allocation0]]
  $region34: #{conv_bn.1} parent=0
    _
  %s6 = ssub.s32 1, %s4
  %s7 = scalar_select 0, %s6, %s4
  $region1: #{conv_bn.1} parent=0
    #allocation2 [shape = 'u8[262144]{0}', space=vmem, size = 0x40000, scoped, tag = 'input window, operand 0, single buffered']
    #allocation3 [shape = 's32[1]{0}', space=sflag, size = 0x4, scoped, tag = 'scoped memory for conv_bn.1']
    #allocation4 [shape = 's32[1]{0}', space=sflag, size = 0x4, scoped, tag = 'scoped memory for conv_bn.1']
    #allocation5 [shape = 'u8[38912]{0}', space=vmem, size = 0x9800, scoped, tag = 'input window, operand 1, single buffered']
    #allocation6 [shape = 's32[1]{0}', space=sflag, size = 0x4, scoped, tag = 'scoped memory for conv_bn.1']
    #allocation7 [shape = 'u8[512]{0}', space=vmem, size = 0x400, scoped, tag = 'input window, operand 2, single buffered']
    #allocation8 [shape = 'u8[131072]{0}', space=vmem, size = 0x20000, scoped, tag = 'output window, operand 0, single buffered']
    %8 = vsyncpa [#allocation3], 0
    %9 = vsyncpa [#allocation6], 0
    %10 = vsyncpa [#allocation4], 0
    // Predicated region
    $region2: #{conv_bn.1} parent=1 // pred_check
      _
    $region3: #{conv_bn.1} parent=1 // pred_check_branch
      %12 = sbr.rel (0) target = $region5
    $region4: #{conv_bn.1} parent=1 // pred_region
      %s14 = ssub.s32 8192, 8192
      %15 = vsyncadd [#allocation3], %s14
      %s16 = sshll.u32 [#allocation2], 4
      %s17 = int_to_ptr.vmem [resolvable:$true] %s16
      %22 = dma.hbm_to_vmem [thread:$0]  %s0, 8192, %s17, [#allocation3], 128, 128, 8
    $region5: #{conv_bn.1} parent=1 // pred_fallthru
      _
    // Predicated region
    $region6: #{conv_bn.1} parent=1 // pred_check
      _
    $region7: #{conv_bn.1} parent=1 // pred_check_branch
      %24 = sbr.rel (0) target = $region9
    $region8: #{conv_bn.1} parent=1 // pred_region
      %s26 = ssub.s32 1216, 1216
      %27 = vsyncadd [#allocation6], %s26
      %s28 = sshll.u32 [#allocation5], 4
      %s29 = int_to_ptr.vmem [resolvable:$true] %s28
      %34 = dma.hbm_to_vmem [thread:$0]  %s1, 1216, %s29, [#allocation6], 64, 64, 4
    $region9: #{conv_bn.1} parent=1 // pred_fallthru
      _
    // Predicated region
    $region10: #{conv_bn.1} parent=1 // pred_check
      _
    $region11: #{conv_bn.1} parent=1 // pred_check_branch
      %36 = sbr.rel (0) target = $region13
    $region12: #{conv_bn.1} parent=1 // pred_region
      %s38 = ssub.s32 16, 16
      %39 = vsyncadd [#allocation6], %s38
      %s41 = sshll.u32 [#allocation7], 4
      %s42 = int_to_ptr.vmem [resolvable:$true] %s41
      %44 = dma.hbm_to_vmem [thread:$0]  %s2, 16, %s42, [#allocation6]
    $region13: #{conv_bn.1} parent=1 // pred_fallthru
      _
    // Predicated region
    $region14: #{conv_bn.1} parent=1 // pred_check
      _
    $region15: #{conv_bn.1} parent=1 // pred_check_branch
      %46 = sbr.rel (0) target = $region17
    $region16: #{conv_bn.1} parent=1 // pred_region
      %47 = dma.done [#allocation3], 8192
    $region17: #{conv_bn.1} parent=1 // pred_fallthru
      _
    // Predicated region
    $region18: #{conv_bn.1} parent=1 // pred_check
      _
    $region19: #{conv_bn.1} parent=1 // pred_check_branch
      %49 = sbr.rel (0) target = $region21
    $region20: #{conv_bn.1} parent=1 // pred_region
      %50 = dma.done [#allocation6], 1216
    $region21: #{conv_bn.1} parent=1 // pred_fallthru
      _
    // Predicated region
    $region22: #{conv_bn.1} parent=1 // pred_check
      _
    $region23: #{conv_bn.1} parent=1 // pred_check_branch
      %52 = sbr.rel (0) target = $region25
    $region24: #{conv_bn.1} parent=1 // pred_region
      %53 = dma.done [#allocation6], 16
    $region25: #{conv_bn.1} parent=1 // pred_fallthru
      _
    %v55 = vld [vmem:[#allocation2] sm:$0xff]
    %v56 = vld [vmem:[#allocation2 + $0x8] sm:$0xff]
    %v57 = vld [vmem:[#allocation2 + $0x10] sm:$0xff]
    %v58 = vld [vmem:[#allocation2 + $0x18] sm:$0xff]
    %v59 = vld [vmem:[#allocation2 + $0x20] sm:$0xff]
    %v60 = vld [vmem:[#allocation2 + $0x28] sm:$0xff]
    %v61 = vld [vmem:[#allocation2 + $0x30] sm:$0xff]
    %v62 = vld [vmem:[#allocation2 + $0x38] sm:$0xff]
    %v63 = vld [vmem:[#allocation2 + $0x40] sm:$0xff]
    %v64 = vld [vmem:[#allocation2 + $0x48] sm:$0xff]
    %v65 = vld [vmem:[#allocation2 + $0x50] sm:$0xff]
    %v66 = vld [vmem:[#allocation2 + $0x58] sm:$0xff]
    %v67 = vld [vmem:[#allocation2 + $0x60] sm:$0xff]
    %v68 = vld [vmem:[#allocation2 + $0x68] sm:$0xff]
    %v69 = vld [vmem:[#allocation2 + $0x70] sm:$0xff]
    %v70 = vld [vmem:[#allocation2 + $0x78] sm:$0xff]
    %v71 = vld [vmem:[#allocation2 + $0x80] sm:$0xff]
    %v72 = vld [vmem:[#allocation2 + $0x88] sm:$0xff]
    %v73 = vld [vmem:[#allocation2 + $0x90] sm:$0xff]
    %v74 = vld [vmem:[#allocation2 + $0x98] sm:$0xff]
    %v75 = vld [vmem:[#allocation2 + $0xa0] sm:$0xff]
    %v76 = vld [vmem:[#allocation2 + $0xa8] sm:$0xff]
    %v77 = vld [vmem:[#allocation2 + $0xb0] sm:$0xff]
    %v78 = vld [vmem:[#allocation2 + $0xb8] sm:$0xff]
    %v79 = vld [vmem:[#allocation2 + $0xc0] sm:$0xff]
    %v80 = vld [vmem:[#allocation2 + $0xc8] sm:$0xff]
    %v81 = vld [vmem:[#allocation2 + $0xd0] sm:$0xff]
    %v82 = vld [vmem:[#allocation2 + $0xd8] sm:$0xff]
    %v83 = vld [vmem:[#allocation2 + $0xe0] sm:$0xff]
    %v84 = vld [vmem:[#allocation2 + $0xe8] sm:$0xff]
    %v85 = vld [vmem:[#allocation2 + $0xf0] sm:$0xff]
    %v86 = vld [vmem:[#allocation2 + $0xf8] sm:$0xff]
    %v87 = vld [vmem:[#allocation2 + $0x100] sm:$0xff]
    %v88 = vld [vmem:[#allocation2 + $0x108] sm:$0xff]
    %v89 = vld [vmem:[#allocation2 + $0x110] sm:$0xff]
    %v90 = vld [vmem:[#allocation2 + $0x118] sm:$0xff]
    %v91 = vld [vmem:[#allocation2 + $0x120] sm:$0xff]
    %v92 = vld [vmem:[#allocation2 + $0x128] sm:$0xff]
    %v93 = vld [vmem:[#allocation2 + $0x130] sm:$0xff]
    %v94 = vld [vmem:[#allocation2 + $0x138] sm:$0xff]
    %v95 = vld [vmem:[#allocation2 + $0x140] sm:$0xff]
    %v96 = vld [vmem:[#allocation2 + $0x148] sm:$0xff]
    %v97 = vld [vmem:[#allocation2 + $0x150] sm:$0xff]
    %v98 = vld [vmem:[#allocation2 + $0x158] sm:$0xff]
    %v99 = vld [vmem:[#allocation2 + $0x160] sm:$0xff]
    %v100 = vld [vmem:[#allocation2 + $0x168] sm:$0xff]
    %v101 = vld [vmem:[#allocation2 + $0x170] sm:$0xff]
    %v102 = vld [vmem:[#allocation2 + $0x178] sm:$0xff]
    %v103 = vld [vmem:[#allocation2 + $0x180] sm:$0xff]
    %v104 = vld [vmem:[#allocation2 + $0x188] sm:$0xff]
    %v105 = vld [vmem:[#allocation2 + $0x190] sm:$0xff]
    %v106 = vld [vmem:[#allocation2 + $0x198] sm:$0xff]
    %v107 = vld [vmem:[#allocation2 + $0x1a0] sm:$0xff]
    %v108 = vld [vmem:[#allocation2 + $0x1a8] sm:$0xff]
    %v109 = vld [vmem:[#allocation2 + $0x1b0] sm:$0xff]
    %v110 = vld [vmem:[#allocation2 + $0x1b8] sm:$0xff]
    %v111 = vld [vmem:[#allocation2 + $0x1c0] sm:$0xff]
    %v112 = vld [vmem:[#allocation2 + $0x1c8] sm:$0xff]
    %v113 = vld [vmem:[#allocation2 + $0x1d0] sm:$0xff]
    %v114 = vld [vmem:[#allocation2 + $0x1d8] sm:$0xff]
    %v115 = vld [vmem:[#allocation2 + $0x1e0] sm:$0xff]
    %v116 = vld [vmem:[#allocation2 + $0x1e8] sm:$0xff]
    %v117 = vld [vmem:[#allocation2 + $0x1f0] sm:$0xff]
    %v118 = vld [vmem:[#allocation2 + $0x1f8] sm:$0xff]
    %v119 = vld [vmem:[#allocation5] sm:$0xf]
    %v120 = vld [vmem:[#allocation5 + $0x4] sm:$0xf]
    %v121 = vld [vmem:[#allocation5 + $0x8] sm:$0xf]
    %v122 = vld [vmem:[#allocation5 + $0xc] sm:$0xf]
    %v123 = vld [vmem:[#allocation5 + $0x10] sm:$0xf]
    %v124 = vld [vmem:[#allocation5 + $0x14] sm:$0xf]
    %v125 = vld [vmem:[#allocation5 + $0x18] sm:$0xf]
    %v126 = vld [vmem:[#allocation5 + $0x1c] sm:$0xf]
    %v127 = vld [vmem:[#allocation5 + $0x20] sm:$0xf]
    %v128 = vld [vmem:[#allocation5 + $0x24] sm:$0xf]
    %v129 = vld [vmem:[#allocation5 + $0x28] sm:$0xf]
    %v130 = vld [vmem:[#allocation5 + $0x2c] sm:$0xf]
    %v131 = vld [vmem:[#allocation5 + $0x30] sm:$0xf]
    %v132 = vld [vmem:[#allocation5 + $0x34] sm:$0xf]
    %v133 = vld [vmem:[#allocation5 + $0x38] sm:$0xf]
    %v134 = vld [vmem:[#allocation5 + $0x3c] sm:$0xf]
    %v135 = vld [vmem:[#allocation5 + $0x40] sm:$0xf]
    %v136 = vld [vmem:[#allocation5 + $0x44] sm:$0xf]
    %v137 = vld [vmem:[#allocation5 + $0x48] sm:$0x3]
    %v138 = vld [vmem:[#allocation7] sm:$0x1]
    %v140 = vlaneseq
    %v141 = vshrl.u32 %v140, 7
    %v142 = vsub.s32 0, %v141
    %v143 = vrot.slane %v138, %v142
    %v209 = vunpack.c.l.b16 %v55
    %v210 = vunpack.c.h.b16 %v55
    %v211 = vunpack.c.l.b16 %v56
    %v212 = vunpack.c.h.b16 %v56
    %v213 = vunpack.c.l.b16 %v57
    %v214 = vunpack.c.h.b16 %v57
    %v215 = vunpack.c.l.b16 %v58
    %v216 = vunpack.c.h.b16 %v58
    %v217 = vunpack.c.l.b16 %v59
    %v218 = vunpack.c.h.b16 %v59
    %v219 = vunpack.c.l.b16 %v60
    %v220 = vunpack.c.h.b16 %v60
    %v221 = vunpack.c.l.b16 %v61
    %v222 = vunpack.c.h.b16 %v61
    %v223 = vunpack.c.l.b16 %v62
    %v224 = vunpack.c.h.b16 %v62
    %v225 = vunpack.c.l.b16 %v63
    %v226 = vunpack.c.h.b16 %v63
    %v227 = vunpack.c.l.b16 %v64
    %v228 = vunpack.c.h.b16 %v64
    %v229 = vunpack.c.l.b16 %v65
    %v230 = vunpack.c.h.b16 %v65
    %v231 = vunpack.c.l.b16 %v66
    %v232 = vunpack.c.h.b16 %v66
    %v233 = vunpack.c.l.b16 %v67
    %v234 = vunpack.c.h.b16 %v67
    %v235 = vunpack.c.l.b16 %v68
    %v236 = vunpack.c.h.b16 %v68
    %v237 = vunpack.c.l.b16 %v69
    %v238 = vunpack.c.h.b16 %v69
    %v239 = vunpack.c.l.b16 %v70
    %v240 = vunpack.c.h.b16 %v70
    %v241 = vunpack.c.l.b16 %v71
    %v242 = vunpack.c.h.b16 %v71
    %v243 = vunpack.c.l.b16 %v72
    %v244 = vunpack.c.h.b16 %v72
    %v245 = vunpack.c.l.b16 %v73
    %v246 = vunpack.c.h.b16 %v73
    %v247 = vunpack.c.l.b16 %v74
    %v248 = vunpack.c.h.b16 %v74
    %v249 = vunpack.c.l.b16 %v75
    %v250 = vunpack.c.h.b16 %v75
    %v251 = vunpack.c.l.b16 %v76
    %v252 = vunpack.c.h.b16 %v76
    %v253 = vunpack.c.l.b16 %v77
    %v254 = vunpack.c.h.b16 %v77
    %v255 = vunpack.c.l.b16 %v78
    %v256 = vunpack.c.h.b16 %v78
    %v257 = vunpack.c.l.b16 %v79
    %v258 = vunpack.c.h.b16 %v79
    %v259 = vunpack.c.l.b16 %v80
    %v260 = vunpack.c.h.b16 %v80
    %v261 = vunpack.c.l.b16 %v81
    %v262 = vunpack.c.h.b16 %v81
    %v263 = vunpack.c.l.b16 %v82
    %v264 = vunpack.c.h.b16 %v82
    %v265 = vunpack.c.l.b16 %v83
    %v266 = vunpack.c.h.b16 %v83
    %v267 = vunpack.c.l.b16 %v84
    %v268 = vunpack.c.h.b16 %v84
    %v269 = vunpack.c.l.b16 %v85
    %v270 = vunpack.c.h.b16 %v85
    %v271 = vunpack.c.l.b16 %v86
    %v272 = vunpack.c.h.b16 %v86
    %v273 = vunpack.c.l.b16 %v87
    %v274 = vunpack.c.h.b16 %v87
    %v275 = vunpack.c.l.b16 %v88
    %v276 = vunpack.c.h.b16 %v88
    %v277 = vunpack.c.l.b16 %v89
    %v278 = vunpack.c.h.b16 %v89
    %v279 = vunpack.c.l.b16 %v90
    %v280 = vunpack.c.h.b16 %v90
    %v281 = vunpack.c.l.b16 %v91
    %v282 = vunpack.c.h.b16 %v91
    %v283 = vunpack.c.l.b16 %v92
    %v284 = vunpack.c.h.b16 %v92
    %v285 = vunpack.c.l.b16 %v93
    %v286 = vunpack.c.h.b16 %v93
    %v287 = vunpack.c.l.b16 %v94
    %v288 = vunpack.c.h.b16 %v94
    %v289 = vunpack.c.l.b16 %v95
    %v290 = vunpack.c.h.b16 %v95
    %v291 = vunpack.c.l.b16 %v96
    %v292 = vunpack.c.h.b16 %v96
    %v293 = vunpack.c.l.b16 %v97
    %v294 = vunpack.c.h.b16 %v97
    %v295 = vunpack.c.l.b16 %v98
    %v296 = vunpack.c.h.b16 %v98
    %v297 = vunpack.c.l.b16 %v99
    %v298 = vunpack.c.h.b16 %v99
    %v299 = vunpack.c.l.b16 %v100
    %v300 = vunpack.c.h.b16 %v100
    %v301 = vunpack.c.l.b16 %v101
    %v302 = vunpack.c.h.b16 %v101
    %v303 = vunpack.c.l.b16 %v102
    %v304 = vunpack.c.h.b16 %v102
    %v305 = vunpack.c.l.b16 %v103
    %v306 = vunpack.c.h.b16 %v103
    %v307 = vunpack.c.l.b16 %v104
    %v308 = vunpack.c.h.b16 %v104
    %v309 = vunpack.c.l.b16 %v105
    %v310 = vunpack.c.h.b16 %v105
    %v311 = vunpack.c.l.b16 %v106
    %v312 = vunpack.c.h.b16 %v106
    %v313 = vunpack.c.l.b16 %v107
    %v314 = vunpack.c.h.b16 %v107
    %v315 = vunpack.c.l.b16 %v108
    %v316 = vunpack.c.h.b16 %v108
    %v317 = vunpack.c.l.b16 %v109
    %v318 = vunpack.c.h.b16 %v109
    %v319 = vunpack.c.l.b16 %v110
    %v320 = vunpack.c.h.b16 %v110
    %v321 = vunpack.c.l.b16 %v111
    %v322 = vunpack.c.h.b16 %v111
    %v323 = vunpack.c.l.b16 %v112
    %v324 = vunpack.c.h.b16 %v112
    %v325 = vunpack.c.l.b16 %v113
    %v326 = vunpack.c.h.b16 %v113
    %v327 = vunpack.c.l.b16 %v114
    %v328 = vunpack.c.h.b16 %v114
    %v329 = vunpack.c.l.b16 %v115
    %v330 = vunpack.c.h.b16 %v115
    %v331 = vunpack.c.l.b16 %v116
    %v332 = vunpack.c.h.b16 %v116
    %v333 = vunpack.c.l.b16 %v117
    %v334 = vunpack.c.h.b16 %v117
    %v335 = vunpack.c.l.b16 %v118
    %v336 = vunpack.c.h.b16 %v118
    %v337 = vpack.c.b16 %v211, %v209
    %v338 = vpack.c.b16 %v212, %v210
    %v339 = vpack.c.b16 %v215, %v213
    %v340 = vpack.c.b16 %v216, %v214
    %v341 = vpack.c.b16 %v219, %v217
    %v342 = vpack.c.b16 %v220, %v218
    %v343 = vpack.c.b16 %v223, %v221
    %v344 = vpack.c.b16 %v224, %v222
    %v345 = vpack.c.b16 %v227, %v225
    %v346 = vpack.c.b16 %v228, %v226
    %v347 = vpack.c.b16 %v231, %v229
    %v348 = vpack.c.b16 %v232, %v230
    %v349 = vpack.c.b16 %v235, %v233
    %v350 = vpack.c.b16 %v236, %v234
    %v351 = vpack.c.b16 %v239, %v237
    %v352 = vpack.c.b16 %v240, %v238
    %v353 = vpack.c.b16 %v243, %v241
    %v354 = vpack.c.b16 %v244, %v242
    %v355 = vpack.c.b16 %v247, %v245
    %v356 = vpack.c.b16 %v248, %v246
    %v357 = vpack.c.b16 %v251, %v249
    %v358 = vpack.c.b16 %v252, %v250
    %v359 = vpack.c.b16 %v255, %v253
    %v360 = vpack.c.b16 %v256, %v254
    %v361 = vpack.c.b16 %v259, %v257
    %v362 = vpack.c.b16 %v260, %v258
    %v363 = vpack.c.b16 %v263, %v261
    %v364 = vpack.c.b16 %v264, %v262
    %v365 = vpack.c.b16 %v267, %v265
    %v366 = vpack.c.b16 %v268, %v266
    %v367 = vpack.c.b16 %v271, %v269
    %v368 = vpack.c.b16 %v272, %v270
    %v369 = vpack.c.b16 %v275, %v273
    %v370 = vpack.c.b16 %v276, %v274
    %v371 = vpack.c.b16 %v279, %v277
    %v372 = vpack.c.b16 %v280, %v278
    %v373 = vpack.c.b16 %v283, %v281
    %v374 = vpack.c.b16 %v284, %v282
    %v375 = vpack.c.b16 %v287, %v285
    %v376 = vpack.c.b16 %v288, %v286
    %v377 = vpack.c.b16 %v291, %v289
    %v378 = vpack.c.b16 %v292, %v290
    %v379 = vpack.c.b16 %v295, %v293
    %v380 = vpack.c.b16 %v296, %v294
    %v381 = vpack.c.b16 %v299, %v297
    %v382 = vpack.c.b16 %v300, %v298
    %v383 = vpack.c.b16 %v303, %v301
    %v384 = vpack.c.b16 %v304, %v302
    %v385 = vpack.c.b16 %v307, %v305
    %v386 = vpack.c.b16 %v308, %v306
    %v387 = vpack.c.b16 %v311, %v309
    %v388 = vpack.c.b16 %v312, %v310
    %v389 = vpack.c.b16 %v315, %v313
    %v390 = vpack.c.b16 %v316, %v314
    %v391 = vpack.c.b16 %v319, %v317
    %v392 = vpack.c.b16 %v320, %v318
    %v393 = vpack.c.b16 %v323, %v321
    %v394 = vpack.c.b16 %v324, %v322
    %v395 = vpack.c.b16 %v327, %v325
    %v396 = vpack.c.b16 %v328, %v326
    %v397 = vpack.c.b16 %v331, %v329
    %v398 = vpack.c.b16 %v332, %v330
    %v399 = vpack.c.b16 %v335, %v333
    %v400 = vpack.c.b16 %v336, %v334
    %v452 = vunpack.c.l.b16 %v119
    %v453 = vunpack.c.l.b16 %v120
    %v454 = vunpack.c.l.b16 %v121
    %v455 = vunpack.c.l.b16 %v122
    %v456 = vunpack.c.l.b16 %v123
    %v457 = vunpack.c.l.b16 %v124
    %v458 = vunpack.c.l.b16 %v125
    %v459 = vunpack.c.l.b16 %v126
    %v460 = vunpack.c.l.b16 %v127
    %v461 = vunpack.c.l.b16 %v128
    %v462 = vunpack.c.l.b16 %v129
    %v463 = vunpack.c.l.b16 %v130
    %v464 = vunpack.c.l.b16 %v131
    %v465 = vunpack.c.l.b16 %v132
    %v466 = vunpack.c.l.b16 %v133
    %v467 = vunpack.c.l.b16 %v134
    %v468 = vunpack.c.l.b16 %v135
    %v469 = vunpack.c.l.b16 %v136
    %v470 = vunpack.c.l.b16 %v137
    %v471 = vpack.c.b16 %v453, %v452
    %v472 = vpack.c.b16 %v455, %v454
    %v473 = vpack.c.b16 %v457, %v456
    %v474 = vpack.c.b16 %v459, %v458
    %v475 = vpack.c.b16 %v461, %v460
    %v476 = vpack.c.b16 %v463, %v462
    %v477 = vpack.c.b16 %v465, %v464
    %v478 = vpack.c.b16 %v467, %v466
    %v479 = vpack.c.b16 %v469, %v468
    %v480 = vpack.c.b16 %v470, %v470
    %vm490 = vcmask 154624
    %v492 = vsel %vm490, %v338, 0
    %v495 = vsel %vm490, %v340, 0
    %v498 = vsel %vm490, %v342, 0
    %v501 = vsel %vm490, %v344, 0
    %v504 = vsel %vm490, %v346, 0
    %v507 = vsel %vm490, %v348, 0
    %v510 = vsel %vm490, %v350, 0
    %v513 = vsel %vm490, %v352, 0
    %v516 = vsel %vm490, %v354, 0
    %v519 = vsel %vm490, %v356, 0
    %v522 = vsel %vm490, %v358, 0
    %v525 = vsel %vm490, %v360, 0
    %v528 = vsel %vm490, %v362, 0
    %v531 = vsel %vm490, %v364, 0
    %v534 = vsel %vm490, %v366, 0
    %v537 = vsel %vm490, %v368, 0
    %v540 = vsel %vm490, %v370, 0
    %v543 = vsel %vm490, %v372, 0
    %v546 = vsel %vm490, %v374, 0
    %v549 = vsel %vm490, %v376, 0
    %v552 = vsel %vm490, %v378, 0
    %v555 = vsel %vm490, %v380, 0
    %v558 = vsel %vm490, %v382, 0
    %v561 = vsel %vm490, %v384, 0
    %v564 = vsel %vm490, %v386, 0
    %v567 = vsel %vm490, %v388, 0
    %v570 = vsel %vm490, %v390, 0
    %v573 = vsel %vm490, %v392, 0
    %v576 = vsel %vm490, %v394, 0
    %v579 = vsel %vm490, %v396, 0
    %v582 = vsel %vm490, %v398, 0
    %v585 = vsel %vm490, %v400, 0
    %vm587 = vcmask 1040384
    %vm588 = vcmask 1041408
    %v589 = vsel %vm587, 4294967295, 65535
    %v590 = vsel %vm588, %v589, 0
    %v592 = vand.u32 %v480, %v590
    %594 = vmatprep.subr.bf16.mxu0 0
    %595 = vmatpush1.bf16.msra.mxu0 %v471
    %596 = vmatprep.subr.bf16.mxu0 0
    %597 = vmatpush1.bf16.msra.mxu0 %v472
    %598 = vmatprep.subr.bf16.mxu0 0
    %599 = vmatpush1.bf16.msra.mxu0 %v473
    %600 = vmatprep.subr.bf16.mxu0 0
    %601 = vmatpush1.bf16.msra.mxu0 %v474
    %602 = vmatprep.subr.bf16.mxu0 0
    %603 = vmatpush1.bf16.msra.mxu0 %v475
    %604 = vmatprep.subr.bf16.mxu0 0
    %605 = vmatpush1.bf16.msra.mxu0 %v476
    %606 = vmatprep.subr.bf16.mxu0 0
    %607 = vmatpush1.bf16.msra.mxu0 %v477
    %608 = vmatprep.subr.bf16.mxu0 0
    %609 = vmatpush1.bf16.msra.mxu0 %v478
    %610 = vmatprep.subr.bf16.mxu0 0
    %611 = vmatpush1.bf16.msra.mxu0 %v479
    %612 = vmatprep.subr.bf16.mxu0 0
    %613 = vmatpush1.bf16.msra.mxu0 %v592
    %614 = vmatprep.subr.bf16.mxu0 0
    %615 = vmatpush1.bf16.msra.mxu0 0
    %616 = vmatprep.subr.bf16.mxu0 0
    %617 = vmatpush1.bf16.msra.mxu0 0
    %618 = vmatprep.subr.bf16.mxu0 0
    %619 = vmatpush1.bf16.msra.mxu0 0
    %620 = vmatprep.subr.bf16.mxu0 0
    %621 = vmatpush1.bf16.msra.mxu0 0
    %622 = vmatprep.subr.bf16.mxu0 0
    %623 = vmatpush1.bf16.msra.mxu0 0
    %624 = vmatprep.subr.bf16.mxu0 0
    %625 = vmatpush1.bf16.msra.mxu0 0
    %626 = vmatprep.mubr.bf16.mxu0 %v492
    %627 = vmatmul.mubr.bf16.gmra.mrb[0].mxu0 %v337
    %v628 = vpop.f32.mrb[0].mxu0
    %v629 = vadd.f32 %v143, %v628
    %v630 = vpop.f32.mrb[0].mxu0
    %v631 = vpop.f32.mrb[0].mxu0
    %v632 = vadd.f32 %v143, %v631
    %v633 = vpop.f32.mrb[0].mxu0
    %634 = vmatprep.mubr.bf16.mxu0 %v495
    %635 = vmatmul.mubr.bf16.gmra.mrb[0].mxu0 %v339
    %v636 = vpop.f32.mrb[0].mxu0
    %v637 = vadd.f32 %v143, %v636
    %v638 = vpop.f32.mrb[0].mxu0
    %v639 = vpop.f32.mrb[0].mxu0
    %v640 = vadd.f32 %v143, %v639
    %v641 = vpop.f32.mrb[0].mxu0
    %642 = vmatprep.mubr.bf16.mxu0 %v498
    %643 = vmatmul.mubr.bf16.gmra.mrb[0].mxu0 %v341
    %v644 = vpop.f32.mrb[0].mxu0
    %v645 = vadd.f32 %v143, %v644
    %v646 = vpop.f32.mrb[0].mxu0
    %v647 = vpop.f32.mrb[0].mxu0
    %v648 = vadd.f32 %v143, %v647
    %v649 = vpop.f32.mrb[0].mxu0
    %650 = vmatprep.mubr.bf16.mxu0 %v501
    %651 = vmatmul.mubr.bf16.gmra.mrb[0].mxu0 %v343
    %v652 = vpop.f32.mrb[0].mxu0
    %v653 = vadd.f32 %v143, %v652
    %v654 = vpop.f32.mrb[0].mxu0
    %v655 = vpop.f32.mrb[0].mxu0
    %v656 = vadd.f32 %v143, %v655
    %v657 = vpop.f32.mrb[0].mxu0
    %658 = vmatprep.mubr.bf16.mxu0 %v504
    %659 = vmatmul.mubr.bf16.gmra.mrb[0].mxu0 %v345
    %v660 = vpop.f32.mrb[0].mxu0
    %v661 = vadd.f32 %v143, %v660
    %v662 = vpop.f32.mrb[0].mxu0
    %v663 = vpop.f32.mrb[0].mxu0
    %v664 = vadd.f32 %v143, %v663
    %v665 = vpop.f32.mrb[0].mxu0
    %666 = vmatprep.mubr.bf16.mxu0 %v507
    %667 = vmatmul.mubr.bf16.gmra.mrb[0].mxu0 %v347
    %v668 = vpop.f32.mrb[0].mxu0
    %v669 = vadd.f32 %v143, %v668
    %v670 = vpop.f32.mrb[0].mxu0
    %v671 = vpop.f32.mrb[0].mxu0
    %v672 = vadd.f32 %v143, %v671
    %v673 = vpop.f32.mrb[0].mxu0
    %674 = vmatprep.mubr.bf16.mxu0 %v510
    %675 = vmatmul.mubr.bf16.gmra.mrb[0].mxu0 %v349
    %v676 = vpop.f32.mrb[0].mxu0
    %v677 = vadd.f32 %v143, %v676
    %v678 = vpop.f32.mrb[0].mxu0
    %v679 = vpop.f32.mrb[0].mxu0
    %v680 = vadd.f32 %v143, %v679
    %v681 = vpop.f32.mrb[0].mxu0
    %682 = vmatprep.mubr.bf16.mxu0 %v513
    %683 = vmatmul.mubr.bf16.gmra.mrb[0].mxu0 %v351
    %v684 = vpop.f32.mrb[0].mxu0
    %v685 = vadd.f32 %v143, %v684
    %v686 = vpop.f32.mrb[0].mxu0
    %v687 = vpop.f32.mrb[0].mxu0
    %v688 = vadd.f32 %v143, %v687
    %v689 = vpop.f32.mrb[0].mxu0
    %690 = vmatprep.mubr.bf16.mxu0 %v516
    %691 = vmatmul.mubr.bf16.gmra.mrb[0].mxu0 %v353
    %v692 = vpop.f32.mrb[0].mxu0
    %v693 = vadd.f32 %v143, %v692
    %v694 = vpop.f32.mrb[0].mxu0
    %v695 = vpop.f32.mrb[0].mxu0
    %v696 = vadd.f32 %v143, %v695
    %v697 = vpop.f32.mrb[0].mxu0
    %698 = vmatprep.mubr.bf16.mxu0 %v519
    %699 = vmatmul.mubr.bf16.gmra.mrb[0].mxu0 %v355
    %v700 = vpop.f32.mrb[0].mxu0
    %v701 = vadd.f32 %v143, %v700
    %v702 = vpop.f32.mrb[0].mxu0
    %v703 = vpop.f32.mrb[0].mxu0
    %v704 = vadd.f32 %v143, %v703
    %v705 = vpop.f32.mrb[0].mxu0
    %706 = vmatprep.mubr.bf16.mxu0 %v522
    %707 = vmatmul.mubr.bf16.gmra.mrb[0].mxu0 %v357
    %v708 = vpop.f32.mrb[0].mxu0
    %v709 = vadd.f32 %v143, %v708
    %v710 = vpop.f32.mrb[0].mxu0
    %v711 = vpop.f32.mrb[0].mxu0
    %v712 = vadd.f32 %v143, %v711
    %v713 = vpop.f32.mrb[0].mxu0
    %714 = vmatprep.mubr.bf16.mxu0 %v525
    %715 = vmatmul.mubr.bf16.gmra.mrb[0].mxu0 %v359
    %v716 = vpop.f32.mrb[0].mxu0
    %v717 = vadd.f32 %v143, %v716
    %v718 = vpop.f32.mrb[0].mxu0
    %v719 = vpop.f32.mrb[0].mxu0
    %v720 = vadd.f32 %v143, %v719
    %v721 = vpop.f32.mrb[0].mxu0
    %722 = vmatprep.mubr.bf16.mxu0 %v528
    %723 = vmatmul.mubr.bf16.gmra.mrb[0].mxu0 %v361
    %v724 = vpop.f32.mrb[0].mxu0
    %v725 = vadd.f32 %v143, %v724
    %v726 = vpop.f32.mrb[0].mxu0
    %v727 = vpop.f32.mrb[0].mxu0
    %v728 = vadd.f32 %v143, %v727
    %v729 = vpop.f32.mrb[0].mxu0
    %730 = vmatprep.mubr.bf16.mxu0 %v531
    %731 = vmatmul.mubr.bf16.gmra.mrb[0].mxu0 %v363
    %v732 = vpop.f32.mrb[0].mxu0
    %v733 = vadd.f32 %v143, %v732
    %v734 = vpop.f32.mrb[0].mxu0
    %v735 = vpop.f32.mrb[0].mxu0
    %v736 = vadd.f32 %v143, %v735
    %v737 = vpop.f32.mrb[0].mxu0
    %738 = vmatprep.mubr.bf16.mxu0 %v534
    %739 = vmatmul.mubr.bf16.gmra.mrb[0].mxu0 %v365
    %v740 = vpop.f32.mrb[0].mxu0
    %v741 = vadd.f32 %v143, %v740
    %v742 = vpop.f32.mrb[0].mxu0
    %v743 = vpop.f32.mrb[0].mxu0
    %v744 = vadd.f32 %v143, %v743
    %v745 = vpop.f32.mrb[0].mxu0
    %746 = vmatprep.mubr.bf16.mxu0 %v537
    %747 = vmatmul.mubr.bf16.gmra.mrb[0].mxu0 %v367
    %v748 = vpop.f32.mrb[0].mxu0
    %v749 = vadd.f32 %v143, %v748
    %v750 = vpop.f32.mrb[0].mxu0
    %v751 = vpop.f32.mrb[0].mxu0
    %v752 = vadd.f32 %v143, %v751
    %v753 = vpop.f32.mrb[0].mxu0
    %754 = vmatprep.mubr.bf16.mxu0 %v540
    %755 = vmatmul.mubr.bf16.gmra.mrb[0].mxu0 %v369
    %v756 = vpop.f32.mrb[0].mxu0
    %v757 = vadd.f32 %v143, %v756
    %v758 = vpop.f32.mrb[0].mxu0
    %v759 = vpop.f32.mrb[0].mxu0
    %v760 = vadd.f32 %v143, %v759
    %v761 = vpop.f32.mrb[0].mxu0
    %762 = vmatprep.mubr.bf16.mxu0 %v543
    %763 = vmatmul.mubr.bf16.gmra.mrb[0].mxu0 %v371
    %v764 = vpop.f32.mrb[0].mxu0
    %v765 = vadd.f32 %v143, %v764
    %v766 = vpop.f32.mrb[0].mxu0
    %v767 = vpop.f32.mrb[0].mxu0
    %v768 = vadd.f32 %v143, %v767
    %v769 = vpop.f32.mrb[0].mxu0
    %770 = vmatprep.mubr.bf16.mxu0 %v546
    %771 = vmatmul.mubr.bf16.gmra.mrb[0].mxu0 %v373
    %v772 = vpop.f32.mrb[0].mxu0
    %v773 = vadd.f32 %v143, %v772
    %v774 = vpop.f32.mrb[0].mxu0
    %v775 = vpop.f32.mrb[0].mxu0
    %v776 = vadd.f32 %v143, %v775
    %v777 = vpop.f32.mrb[0].mxu0
    %778 = vmatprep.mubr.bf16.mxu0 %v549
    %779 = vmatmul.mubr.bf16.gmra.mrb[0].mxu0 %v375
    %v780 = vpop.f32.mrb[0].mxu0
    %v781 = vadd.f32 %v143, %v780
    %v782 = vpop.f32.mrb[0].mxu0
    %v783 = vpop.f32.mrb[0].mxu0
    %v784 = vadd.f32 %v143, %v783
    %v785 = vpop.f32.mrb[0].mxu0
    %786 = vmatprep.mubr.bf16.mxu0 %v552
    %787 = vmatmul.mubr.bf16.gmra.mrb[0].mxu0 %v377
    %v788 = vpop.f32.mrb[0].mxu0
    %v789 = vadd.f32 %v143, %v788
    %v790 = vpop.f32.mrb[0].mxu0
    %v791 = vpop.f32.mrb[0].mxu0
    %v792 = vadd.f32 %v143, %v791
    %v793 = vpop.f32.mrb[0].mxu0
    %794 = vmatprep.mubr.bf16.mxu0 %v555
    %795 = vmatmul.mubr.bf16.gmra.mrb[0].mxu0 %v379
    %v796 = vpop.f32.mrb[0].mxu0
    %v797 = vadd.f32 %v143, %v796
    %v798 = vpop.f32.mrb[0].mxu0
    %v799 = vpop.f32.mrb[0].mxu0
    %v800 = vadd.f32 %v143, %v799
    %v801 = vpop.f32.mrb[0].mxu0
    %802 = vmatprep.mubr.bf16.mxu0 %v558
    %803 = vmatmul.mubr.bf16.gmra.mrb[0].mxu0 %v381
    %v804 = vpop.f32.mrb[0].mxu0
    %v805 = vadd.f32 %v143, %v804
    %v806 = vpop.f32.mrb[0].mxu0
    %v807 = vpop.f32.mrb[0].mxu0
    %v808 = vadd.f32 %v143, %v807
    %v809 = vpop.f32.mrb[0].mxu0
    %810 = vmatprep.mubr.bf16.mxu0 %v561
    %811 = vmatmul.mubr.bf16.gmra.mrb[0].mxu0 %v383
    %v812 = vpop.f32.mrb[0].mxu0
    %v813 = vadd.f32 %v143, %v812
    %v814 = vpop.f32.mrb[0].mxu0
    %v815 = vpop.f32.mrb[0].mxu0
    %v816 = vadd.f32 %v143, %v815
    %v817 = vpop.f32.mrb[0].mxu0
    %818 = vmatprep.mubr.bf16.mxu0 %v564
    %819 = vmatmul.mubr.bf16.gmra.mrb[0].mxu0 %v385
    %v820 = vpop.f32.mrb[0].mxu0
    %v821 = vadd.f32 %v143, %v820
    %v822 = vpop.f32.mrb[0].mxu0
    %v823 = vpop.f32.mrb[0].mxu0
    %v824 = vadd.f32 %v143, %v823
    %v825 = vpop.f32.mrb[0].mxu0
    %826 = vmatprep.mubr.bf16.mxu0 %v567
    %827 = vmatmul.mubr.bf16.gmra.mrb[0].mxu0 %v387
    %v828 = vpop.f32.mrb[0].mxu0
    %v829 = vadd.f32 %v143, %v828
    %v830 = vpop.f32.mrb[0].mxu0
    %v831 = vpop.f32.mrb[0].mxu0
    %v832 = vadd.f32 %v143, %v831
    %v833 = vpop.f32.mrb[0].mxu0
    %834 = vmatprep.mubr.bf16.mxu0 %v570
    %835 = vmatmul.mubr.bf16.gmra.mrb[0].mxu0 %v389
    %v836 = vpop.f32.mrb[0].mxu0
    %v837 = vadd.f32 %v143, %v836
    %v838 = vpop.f32.mrb[0].mxu0
    %v839 = vpop.f32.mrb[0].mxu0
    %v840 = vadd.f32 %v143, %v839
    %v841 = vpop.f32.mrb[0].mxu0
    %842 = vmatprep.mubr.bf16.mxu0 %v573
    %843 = vmatmul.mubr.bf16.gmra.mrb[0].mxu0 %v391
    %v844 = vpop.f32.mrb[0].mxu0
    %v845 = vadd.f32 %v143, %v844
    %v846 = vpop.f32.mrb[0].mxu0
    %v847 = vpop.f32.mrb[0].mxu0
    %v848 = vadd.f32 %v143, %v847
    %v849 = vpop.f32.mrb[0].mxu0
    %850 = vmatprep.mubr.bf16.mxu0 %v576
    %851 = vmatmul.mubr.bf16.gmra.mrb[0].mxu0 %v393
    %v852 = vpop.f32.mrb[0].mxu0
    %v853 = vadd.f32 %v143, %v852
    %v854 = vpop.f32.mrb[0].mxu0
    %v855 = vpop.f32.mrb[0].mxu0
    %v856 = vadd.f32 %v143, %v855
    %v857 = vpop.f32.mrb[0].mxu0
    %858 = vmatprep.mubr.bf16.mxu0 %v579
    %859 = vmatmul.mubr.bf16.gmra.mrb[0].mxu0 %v395
    %v860 = vpop.f32.mrb[0].mxu0
    %v861 = vadd.f32 %v143, %v860
    %v862 = vpop.f32.mrb[0].mxu0
    %v863 = vpop.f32.mrb[0].mxu0
    %v864 = vadd.f32 %v143, %v863
    %v865 = vpop.f32.mrb[0].mxu0
    %866 = vmatprep.mubr.bf16.mxu0 %v582
    %867 = vmatmul.mubr.bf16.gmra.mrb[0].mxu0 %v397
    %v868 = vpop.f32.mrb[0].mxu0
    %v869 = vadd.f32 %v143, %v868
    %v870 = vpop.f32.mrb[0].mxu0
    %v871 = vpop.f32.mrb[0].mxu0
    %v872 = vadd.f32 %v143, %v871
    %v873 = vpop.f32.mrb[0].mxu0
    %874 = vmatprep.mubr.bf16.mxu0 %v585
    %875 = vmatmul.mubr.bf16.gmra.mrb[0].mxu0 %v399
    %v876 = vpop.f32.mrb[0].mxu0
    %v877 = vadd.f32 %v143, %v876
    %v878 = vpop.f32.mrb[0].mxu0
    %v879 = vpop.f32.mrb[0].mxu0
    %v880 = vadd.f32 %v143, %v879
    %v881 = vpop.f32.mrb[0].mxu0
    %882 = vdwg.mxu0
    %v883 = vmax.f32 %v629, 0.0
    %v884 = vmax.f32 %v632, 0.0
    %v885 = vmax.f32 %v637, 0.0
    %v886 = vmax.f32 %v640, 0.0
    %v887 = vmax.f32 %v645, 0.0
    %v888 = vmax.f32 %v648, 0.0
    %v889 = vmax.f32 %v653, 0.0
    %v890 = vmax.f32 %v656, 0.0
    %v891 = vmax.f32 %v661, 0.0
    %v892 = vmax.f32 %v664, 0.0
    %v893 = vmax.f32 %v669, 0.0
    %v894 = vmax.f32 %v672, 0.0
    %v895 = vmax.f32 %v677, 0.0
    %v896 = vmax.f32 %v680, 0.0
    %v897 = vmax.f32 %v685, 0.0
    %v898 = vmax.f32 %v688, 0.0
    %v899 = vmax.f32 %v693, 0.0
    %v900 = vmax.f32 %v696, 0.0
    %v901 = vmax.f32 %v701, 0.0
    %v902 = vmax.f32 %v704, 0.0
    %v903 = vmax.f32 %v709, 0.0
    %v904 = vmax.f32 %v712, 0.0
    %v905 = vmax.f32 %v717, 0.0
    %v906 = vmax.f32 %v720, 0.0
    %v907 = vmax.f32 %v725, 0.0
    %v908 = vmax.f32 %v728, 0.0
    %v909 = vmax.f32 %v733, 0.0
    %v910 = vmax.f32 %v736, 0.0
    %v911 = vmax.f32 %v741, 0.0
    %v912 = vmax.f32 %v744, 0.0
    %v913 = vmax.f32 %v749, 0.0
    %v914 = vmax.f32 %v752, 0.0
    %v915 = vmax.f32 %v757, 0.0
    %v916 = vmax.f32 %v760, 0.0
    %v917 = vmax.f32 %v765, 0.0
    %v918 = vmax.f32 %v768, 0.0
    %v919 = vmax.f32 %v773, 0.0
    %v920 = vmax.f32 %v776, 0.0
    %v921 = vmax.f32 %v781, 0.0
    %v922 = vmax.f32 %v784, 0.0
    %v923 = vmax.f32 %v789, 0.0
    %v924 = vmax.f32 %v792, 0.0
    %v925 = vmax.f32 %v797, 0.0
    %v926 = vmax.f32 %v800, 0.0
    %v927 = vmax.f32 %v805, 0.0
    %v928 = vmax.f32 %v808, 0.0
    %v929 = vmax.f32 %v813, 0.0
    %v930 = vmax.f32 %v816, 0.0
    %v931 = vmax.f32 %v821, 0.0
    %v932 = vmax.f32 %v824, 0.0
    %v933 = vmax.f32 %v829, 0.0
    %v934 = vmax.f32 %v832, 0.0
    %v935 = vmax.f32 %v837, 0.0
    %v936 = vmax.f32 %v840, 0.0
    %v937 = vmax.f32 %v845, 0.0
    %v938 = vmax.f32 %v848, 0.0
    %v939 = vmax.f32 %v853, 0.0
    %v940 = vmax.f32 %v856, 0.0
    %v941 = vmax.f32 %v861, 0.0
    %v942 = vmax.f32 %v864, 0.0
    %v943 = vmax.f32 %v869, 0.0
    %v944 = vmax.f32 %v872, 0.0
    %v945 = vmax.f32 %v877, 0.0
    %v946 = vmax.f32 %v880, 0.0
    %v947 = vpack.c.bf16 %v884, %v883
    %v948 = vpack.c.bf16 %v886, %v885
    %v949 = vpack.c.bf16 %v888, %v887
    %v950 = vpack.c.bf16 %v890, %v889
    %v951 = vpack.c.bf16 %v892, %v891
    %v952 = vpack.c.bf16 %v894, %v893
    %v953 = vpack.c.bf16 %v896, %v895
    %v954 = vpack.c.bf16 %v898, %v897
    %v955 = vpack.c.bf16 %v900, %v899
    %v956 = vpack.c.bf16 %v902, %v901
    %v957 = vpack.c.bf16 %v904, %v903
    %v958 = vpack.c.bf16 %v906, %v905
    %v959 = vpack.c.bf16 %v908, %v907
    %v960 = vpack.c.bf16 %v910, %v909
    %v961 = vpack.c.bf16 %v912, %v911
    %v962 = vpack.c.bf16 %v914, %v913
    %v963 = vpack.c.bf16 %v916, %v915
    %v964 = vpack.c.bf16 %v918, %v917
    %v965 = vpack.c.bf16 %v920, %v919
    %v966 = vpack.c.bf16 %v922, %v921
    %v967 = vpack.c.bf16 %v924, %v923
    %v968 = vpack.c.bf16 %v926, %v925
    %v969 = vpack.c.bf16 %v928, %v927
    %v970 = vpack.c.bf16 %v930, %v929
    %v971 = vpack.c.bf16 %v932, %v931
    %v972 = vpack.c.bf16 %v934, %v933
    %v973 = vpack.c.bf16 %v936, %v935
    %v974 = vpack.c.bf16 %v938, %v937
    %v975 = vpack.c.bf16 %v940, %v939
    %v976 = vpack.c.bf16 %v942, %v941
    %v977 = vpack.c.bf16 %v944, %v943
    %v978 = vpack.c.bf16 %v946, %v945
    %v1011 = vunpack.c.l.b16 %v947
    %v1012 = vunpack.c.h.b16 %v947
    %v1013 = vunpack.c.l.b16 %v948
    %v1014 = vunpack.c.h.b16 %v948
    %v1015 = vunpack.c.l.b16 %v949
    %v1016 = vunpack.c.h.b16 %v949
    %v1017 = vunpack.c.l.b16 %v950
    %v1018 = vunpack.c.h.b16 %v950
    %v1019 = vunpack.c.l.b16 %v951
    %v1020 = vunpack.c.h.b16 %v951
    %v1021 = vunpack.c.l.b16 %v952
    %v1022 = vunpack.c.h.b16 %v952
    %v1023 = vunpack.c.l.b16 %v953
    %v1024 = vunpack.c.h.b16 %v953
    %v1025 = vunpack.c.l.b16 %v954
    %v1026 = vunpack.c.h.b16 %v954
    %v1027 = vunpack.c.l.b16 %v955
    %v1028 = vunpack.c.h.b16 %v955
    %v1029 = vunpack.c.l.b16 %v956
    %v1030 = vunpack.c.h.b16 %v956
    %v1031 = vunpack.c.l.b16 %v957
    %v1032 = vunpack.c.h.b16 %v957
    %v1033 = vunpack.c.l.b16 %v958
    %v1034 = vunpack.c.h.b16 %v958
    %v1035 = vunpack.c.l.b16 %v959
    %v1036 = vunpack.c.h.b16 %v959
    %v1037 = vunpack.c.l.b16 %v960
    %v1038 = vunpack.c.h.b16 %v960
    %v1039 = vunpack.c.l.b16 %v961
    %v1040 = vunpack.c.h.b16 %v961
    %v1041 = vunpack.c.l.b16 %v962
    %v1042 = vunpack.c.h.b16 %v962
    %v1043 = vunpack.c.l.b16 %v963
    %v1044 = vunpack.c.h.b16 %v963
    %v1045 = vunpack.c.l.b16 %v964
    %v1046 = vunpack.c.h.b16 %v964
    %v1047 = vunpack.c.l.b16 %v965
    %v1048 = vunpack.c.h.b16 %v965
    %v1049 = vunpack.c.l.b16 %v966
    %v1050 = vunpack.c.h.b16 %v966
    %v1051 = vunpack.c.l.b16 %v967
    %v1052 = vunpack.c.h.b16 %v967
    %v1053 = vunpack.c.l.b16 %v968
    %v1054 = vunpack.c.h.b16 %v968
    %v1055 = vunpack.c.l.b16 %v969
    %v1056 = vunpack.c.h.b16 %v969
    %v1057 = vunpack.c.l.b16 %v970
    %v1058 = vunpack.c.h.b16 %v970
    %v1059 = vunpack.c.l.b16 %v971
    %v1060 = vunpack.c.h.b16 %v971
    %v1061 = vunpack.c.l.b16 %v972
    %v1062 = vunpack.c.h.b16 %v972
    %v1063 = vunpack.c.l.b16 %v973
    %v1064 = vunpack.c.h.b16 %v973
    %v1065 = vunpack.c.l.b16 %v974
    %v1066 = vunpack.c.h.b16 %v974
    %v1067 = vunpack.c.l.b16 %v975
    %v1068 = vunpack.c.h.b16 %v975
    %v1069 = vunpack.c.l.b16 %v976
    %v1070 = vunpack.c.h.b16 %v976
    %v1071 = vunpack.c.l.b16 %v977
    %v1072 = vunpack.c.h.b16 %v977
    %v1073 = vunpack.c.l.b16 %v978
    %v1074 = vunpack.c.h.b16 %v978
    %v1075 = vpack.c.b16 %v1011, %v1011
    %v1076 = vpack.c.b16 %v1012, %v1012
    %v1077 = vpack.c.b16 %v1013, %v1013
    %v1078 = vpack.c.b16 %v1014, %v1014
    %v1079 = vpack.c.b16 %v1015, %v1015
    %v1080 = vpack.c.b16 %v1016, %v1016
    %v1081 = vpack.c.b16 %v1017, %v1017
    %v1082 = vpack.c.b16 %v1018, %v1018
    %v1083 = vpack.c.b16 %v1019, %v1019
    %v1084 = vpack.c.b16 %v1020, %v1020
    %v1085 = vpack.c.b16 %v1021, %v1021
    %v1086 = vpack.c.b16 %v1022, %v1022
    %v1087 = vpack.c.b16 %v1023, %v1023
    %v1088 = vpack.c.b16 %v1024, %v1024
    %v1089 = vpack.c.b16 %v1025, %v1025
    %v1090 = vpack.c.b16 %v1026, %v1026
    %v1091 = vpack.c.b16 %v1027, %v1027
    %v1092 = vpack.c.b16 %v1028, %v1028
    %v1093 = vpack.c.b16 %v1029, %v1029
    %v1094 = vpack.c.b16 %v1030, %v1030
    %v1095 = vpack.c.b16 %v1031, %v1031
    %v1096 = vpack.c.b16 %v1032, %v1032
    %v1097 = vpack.c.b16 %v1033, %v1033
    %v1098 = vpack.c.b16 %v1034, %v1034
    %v1099 = vpack.c.b16 %v1035, %v1035
    %v1100 = vpack.c.b16 %v1036, %v1036
    %v1101 = vpack.c.b16 %v1037, %v1037
    %v1102 = vpack.c.b16 %v1038, %v1038
    %v1103 = vpack.c.b16 %v1039, %v1039
    %v1104 = vpack.c.b16 %v1040, %v1040
    %v1105 = vpack.c.b16 %v1041, %v1041
    %v1106 = vpack.c.b16 %v1042, %v1042
    %v1107 = vpack.c.b16 %v1043, %v1043
    %v1108 = vpack.c.b16 %v1044, %v1044
    %v1109 = vpack.c.b16 %v1045, %v1045
    %v1110 = vpack.c.b16 %v1046, %v1046
    %v1111 = vpack.c.b16 %v1047, %v1047
    %v1112 = vpack.c.b16 %v1048, %v1048
    %v1113 = vpack.c.b16 %v1049, %v1049
    %v1114 = vpack.c.b16 %v1050, %v1050
    %v1115 = vpack.c.b16 %v1051, %v1051
    %v1116 = vpack.c.b16 %v1052, %v1052
    %v1117 = vpack.c.b16 %v1053, %v1053
    %v1118 = vpack.c.b16 %v1054, %v1054
    %v1119 = vpack.c.b16 %v1055, %v1055
    %v1120 = vpack.c.b16 %v1056, %v1056
    %v1121 = vpack.c.b16 %v1057, %v1057
    %v1122 = vpack.c.b16 %v1058, %v1058
    %v1123 = vpack.c.b16 %v1059, %v1059
    %v1124 = vpack.c.b16 %v1060, %v1060
    %v1125 = vpack.c.b16 %v1061, %v1061
    %v1126 = vpack.c.b16 %v1062, %v1062
    %v1127 = vpack.c.b16 %v1063, %v1063
    %v1128 = vpack.c.b16 %v1064, %v1064
    %v1129 = vpack.c.b16 %v1065, %v1065
    %v1130 = vpack.c.b16 %v1066, %v1066
    %v1131 = vpack.c.b16 %v1067, %v1067
    %v1132 = vpack.c.b16 %v1068, %v1068
    %v1133 = vpack.c.b16 %v1069, %v1069
    %v1134 = vpack.c.b16 %v1070, %v1070
    %v1135 = vpack.c.b16 %v1071, %v1071
    %v1136 = vpack.c.b16 %v1072, %v1072
    %v1137 = vpack.c.b16 %v1073, %v1073
    %v1138 = vpack.c.b16 %v1074, %v1074
    %vm1203 = vcmask 519168
    %1204 = vst.msk [vmem:[#allocation8] sm:$0xf] %vm1203, %v1075
    %1205 = vst.msk [vmem:[#allocation8 + $0x4] sm:$0xf] %vm1203, %v1076
    %1206 = vst.msk [vmem:[#allocation8 + $0x8] sm:$0xf] %vm1203, %v1077
    %1207 = vst.msk [vmem:[#allocation8 + $0xc] sm:$0xf] %vm1203, %v1078
    %1208 = vst.msk [vmem:[#allocation8 + $0x10] sm:$0xf] %vm1203, %v1079
    %1209 = vst.msk [vmem:[#allocation8 + $0x14] sm:$0xf] %vm1203, %v1080
    %1210 = vst.msk [vmem:[#allocation8 + $0x18] sm:$0xf] %vm1203, %v1081
    %1211 = vst.msk [vmem:[#allocation8 + $0x1c] sm:$0xf] %vm1203, %v1082
    %1212 = vst.msk [vmem:[#allocation8 + $0x20] sm:$0xf] %vm1203, %v1083
    %1213 = vst.msk [vmem:[#allocation8 + $0x24] sm:$0xf] %vm1203, %v1084
    %1214 = vst.msk [vmem:[#allocation8 + $0x28] sm:$0xf] %vm1203, %v1085
    %1215 = vst.msk [vmem:[#allocation8 + $0x2c] sm:$0xf] %vm1203, %v1086
    %1216 = vst.msk [vmem:[#allocation8 + $0x30] sm:$0xf] %vm1203, %v1087
    %1217 = vst.msk [vmem:[#allocation8 + $0x34] sm:$0xf] %vm1203, %v1088
    %1218 = vst.msk [vmem:[#allocation8 + $0x38] sm:$0xf] %vm1203, %v1089
    %1219 = vst.msk [vmem:[#allocation8 + $0x3c] sm:$0xf] %vm1203, %v1090
    %1220 = vst.msk [vmem:[#allocation8 + $0x40] sm:$0xf] %vm1203, %v1091
    %1221 = vst.msk [vmem:[#allocation8 + $0x44] sm:$0xf] %vm1203, %v1092
    %1222 = vst.msk [vmem:[#allocation8 + $0x48] sm:$0xf] %vm1203, %v1093
    %1223 = vst.msk [vmem:[#allocation8 + $0x4c] sm:$0xf] %vm1203, %v1094
    %1224 = vst.msk [vmem:[#allocation8 + $0x50] sm:$0xf] %vm1203, %v1095
    %1225 = vst.msk [vmem:[#allocation8 + $0x54] sm:$0xf] %vm1203, %v1096
    %1226 = vst.msk [vmem:[#allocation8 + $0x58] sm:$0xf] %vm1203, %v1097
    %1227 = vst.msk [vmem:[#allocation8 + $0x5c] sm:$0xf] %vm1203, %v1098
    %1228 = vst.msk [vmem:[#allocation8 + $0x60] sm:$0xf] %vm1203, %v1099
    %1229 = vst.msk [vmem:[#allocation8 + $0x64] sm:$0xf] %vm1203, %v1100
    %1230 = vst.msk [vmem:[#allocation8 + $0x68] sm:$0xf] %vm1203, %v1101
    %1231 = vst.msk [vmem:[#allocation8 + $0x6c] sm:$0xf] %vm1203, %v1102
    %1232 = vst.msk [vmem:[#allocation8 + $0x70] sm:$0xf] %vm1203, %v1103
    %1233 = vst.msk [vmem:[#allocation8 + $0x74] sm:$0xf] %vm1203, %v1104
    %1234 = vst.msk [vmem:[#allocation8 + $0x78] sm:$0xf] %vm1203, %v1105
    %1235 = vst.msk [vmem:[#allocation8 + $0x7c] sm:$0xf] %vm1203, %v1106
    %1236 = vst.msk [vmem:[#allocation8 + $0x80] sm:$0xf] %vm1203, %v1107
    %1237 = vst.msk [vmem:[#allocation8 + $0x84] sm:$0xf] %vm1203, %v1108
    %1238 = vst.msk [vmem:[#allocation8 + $0x88] sm:$0xf] %vm1203, %v1109
    %1239 = vst.msk [vmem:[#allocation8 + $0x8c] sm:$0xf] %vm1203, %v1110
    %1240 = vst.msk [vmem:[#allocation8 + $0x90] sm:$0xf] %vm1203, %v1111
    %1241 = vst.msk [vmem:[#allocation8 + $0x94] sm:$0xf] %vm1203, %v1112
    %1242 = vst.msk [vmem:[#allocation8 + $0x98] sm:$0xf] %vm1203, %v1113
    %1243 = vst.msk [vmem:[#allocation8 + $0x9c] sm:$0xf] %vm1203, %v1114
    %1244 = vst.msk [vmem:[#allocation8 + $0xa0] sm:$0xf] %vm1203, %v1115
    %1245 = vst.msk [vmem:[#allocation8 + $0xa4] sm:$0xf] %vm1203, %v1116
    %1246 = vst.msk [vmem:[#allocation8 + $0xa8] sm:$0xf] %vm1203, %v1117
    %1247 = vst.msk [vmem:[#allocation8 + $0xac] sm:$0xf] %vm1203, %v1118
    %1248 = vst.msk [vmem:[#allocation8 + $0xb0] sm:$0xf] %vm1203, %v1119
    %1249 = vst.msk [vmem:[#allocation8 + $0xb4] sm:$0xf] %vm1203, %v1120
    %1250 = vst.msk [vmem:[#allocation8 + $0xb8] sm:$0xf] %vm1203, %v1121
    %1251 = vst.msk [vmem:[#allocation8 + $0xbc] sm:$0xf] %vm1203, %v1122
    %1252 = vst.msk [vmem:[#allocation8 + $0xc0] sm:$0xf] %vm1203, %v1123
    %1253 = vst.msk [vmem:[#allocation8 + $0xc4] sm:$0xf] %vm1203, %v1124
    %1254 = vst.msk [vmem:[#allocation8 + $0xc8] sm:$0xf] %vm1203, %v1125
    %1255 = vst.msk [vmem:[#allocation8 + $0xcc] sm:$0xf] %vm1203, %v1126
    %1256 = vst.msk [vmem:[#allocation8 + $0xd0] sm:$0xf] %vm1203, %v1127
    %1257 = vst.msk [vmem:[#allocation8 + $0xd4] sm:$0xf] %vm1203, %v1128
    %1258 = vst.msk [vmem:[#allocation8 + $0xd8] sm:$0xf] %vm1203, %v1129
    %1259 = vst.msk [vmem:[#allocation8 + $0xdc] sm:$0xf] %vm1203, %v1130
    %1260 = vst.msk [vmem:[#allocation8 + $0xe0] sm:$0xf] %vm1203, %v1131
    %1261 = vst.msk [vmem:[#allocation8 + $0xe4] sm:$0xf] %vm1203, %v1132
    %1262 = vst.msk [vmem:[#allocation8 + $0xe8] sm:$0xf] %vm1203, %v1133
    %1263 = vst.msk [vmem:[#allocation8 + $0xec] sm:$0xf] %vm1203, %v1134
    %1264 = vst.msk [vmem:[#allocation8 + $0xf0] sm:$0xf] %vm1203, %v1135
    %1265 = vst.msk [vmem:[#allocation8 + $0xf4] sm:$0xf] %vm1203, %v1136
    %1266 = vst.msk [vmem:[#allocation8 + $0xf8] sm:$0xf] %vm1203, %v1137
    %1267 = vst.msk [vmem:[#allocation8 + $0xfc] sm:$0xf] %vm1203, %v1138
    // Predicated region
    $region26: #{conv_bn.1} parent=1 // pred_check
      _
    $region27: #{conv_bn.1} parent=1 // pred_check_branch
      %1269 = sbr.rel (0) target = $region29
    $region28: #{conv_bn.1} parent=1 // pred_region
      %s1271 = ssub.s32 4096, 4096
      %1272 = vsyncadd [#allocation4], %s1271
      %s1273 = sshll.u32 [#allocation8], 4
      %s1274 = int_to_ptr.vmem [resolvable:$true] %s1273
      %1279 = dma.vmem_to_hbm [thread:$0]  %s1274, 4096, %s3, [#allocation4], 64, 64, 4
    $region29: #{conv_bn.1} parent=1 // pred_fallthru
      _
    // Predicated region
    $region30: #{conv_bn.1} parent=1 // pred_check
      _
    $region31: #{conv_bn.1} parent=1 // pred_check_branch
      %1281 = sbr.rel (0) target = $region33
    $region32: #{conv_bn.1} parent=1 // pred_region
      %1282 = dma.done [#allocation4], 4096
    $region33: #{conv_bn.1} parent=1 // pred_fallthru
      _
    %1283 = vsyncpa [#allocation3], 1
    %1284 = vsyncpa [#allocation6], 1
    %1285 = vsyncpa [#allocation4], 1

</llo_original>
